<compile_context>
chip_gen: v7x
topology: tpu7x:2x2x1
jax: 0.10.0
libtpu: 0.0.40
codegen_flags: <defaults>
</compile_context>

<pallas_src>
import jax
import jax.numpy as jnp
from jax import lax
from jax.experimental import pallas as pl
from jax.experimental.pallas import tpu as pltpu

EPS = 1e-5  # nn.BatchNorm1d default


def _sigmoid_f32(x):
    # Exact identity sigmoid(x) = 0.5*tanh(x/2) + 0.5 -> single EUP op.
    return 0.5 * jnp.tanh(0.5 * x.astype(jnp.float32)) + 0.5


def _sublane_multiple(itemsize):
    # Native sublane packing: 8 rows for 4-byte, 16 for 2-byte, 32 for 1-byte.
    return max(8, 32 // max(1, int(itemsize)))


def _default_vmem_limit():
    """Generation-gated scoped-VMEM limit (conservative if chip is unknown)."""
    try:
        kind = jax.devices()[0].device_kind.lower()
    except Exception:
        kind = ""
    if "v7" in kind:
        return 48 * 1024 * 1024      # v7x: 64 MiB physical per TensorCore
    if "v5" in kind or "v6" in kind:
        return 64 * 1024 * 1024      # v5e / v6e: 128 MiB physical
    return 32 * 1024 * 1024          # unknown chip: safe everywhere


# ----------------------------- fused single pass -----------------------------

def _choose_fused_tile_c(N, C, L, in_item, out_item, vmem_budget, sub_mult):
    """Largest channel tile whose full (N, tile_c, L) slab fits VMEM, or None."""
    # double-buffered input + output blocks + ~2 block-sized f32 temporaries
    per_elem = 2 * in_item + 2 * out_item + 8
    max_elems = vmem_budget // per_elem
    per_ch = N * L
    tc = max_elems // per_ch if per_ch > 0 else 0
    if tc >= C:
        tile_c = C
    elif C > sub_mult and tc >= sub_mult:
        tile_c = (tc // sub_mult) * sub_mult
    else:
        return None   # even one sub_mult-channel slab doesn't fit -> 2-pass path
    # Ensure >= 2 grid steps when C allows: keeps both v7x TensorCores busy and
    # lets the pipeline overlap DMA with compute (harmless on 1-TC chips).
    if tile_c >= C and C >= 2 * sub_mult:
        tile_c = max(sub_mult, ((C // 2) // sub_mult) * sub_mult)
    return int(tile_c)


def _make_fused_kernel(N, L):
    inv = 1.0 / float(N * L)

    def kernel(x_ref, o_ref):
        # NOTE: if C % tile_c != 0, the padded rows of the last channel tile hold
        # garbage; per-channel reductions keep it confined to those rows and
        # Pallas discards the writes to padded output rows.
        s = _sigmoid_f32(x_ref[...])                        # (N, TC, L) f32
        ps = jnp.sum(s, axis=0)                             # (TC, L)
        mean = jnp.sum(ps, axis=1, keepdims=True) * inv     # (TC, 1)
        d = s - mean[None, :, :]
        pd = jnp.sum(d * d, axis=0)                         # (TC, L)
        var = jnp.sum(pd, axis=1, keepdims=True) * inv      # (TC, 1) centered
        scale = lax.rsqrt(var + EPS)
        o_ref[...] = (d * scale[None, :, :]).astype(o_ref.dtype)

    return kernel


# ------------------------------ 2-pass fallback -------------------------------

def _pick_tile_l(L, max_l):
    """Largest legal length tile <= max_l; prefer a multiple of 128 dividing L."""
    if L <= max_l:
        return L
    cap = max(128, (max_l // 128) * 128)
    t = cap
    while t >= 128:
        if L % t == 0:
            return t               # divides L: no masked tail, no padded DMA
        t -= 128
    return cap                     # masked tail on the last length tile


def _choose_two_pass_tiles(N, C, L, itemsize, target_block_bytes, sub_mult):
    max_elems = max(1, target_block_bytes // itemsize)
    tc_full_l = max_elems // max(1, N * L)
    if tc_full_l >= sub_mult or tc_full_l >= C:
        # Full length per block (contiguous DMA runs), shrink channels only.
        tile_c = C if tc_full_l >= C else (tc_full_l // sub_mult) * sub_mult
        tile_c = min(int(tile_c), C)
        tile_l = L
    else:
        tile_c = C if C <= sub_mult else sub_mult
        tile_l = _pick_tile_l(L, max(1, max_elems // (N * tile_c)))
    # Ensure >= 2 channel tiles when C allows (megacore + pipelining).
    if tile_c >= C and C >= 2 * sub_mult:
        tile_c = max(sub_mult, ((C // 2) // sub_mult) * sub_mult)
    return int(tile_c), int(tile_l)


def _make_stats_kernel(count, L, tile_l):
    """Per-channel mean and rsqrt(var + eps) via a fused sum / sum-of-squares sweep."""
    inv_count = 1.0 / float(count)
    needs_mask = (L % tile_l) != 0

    def kernel(x_ref, mean_ref, scale_ref):
        j = pl.program_id(1)

        @pl.when(j == 0)
        def _init():
            mean_ref[...] = jnp.zeros_like(mean_ref)
            scale_ref[...] = jnp.zeros_like(scale_ref)

        s = _sigmoid_f32(x_ref[...])                          # (N, TC, TL)
        if needs_mask:  # only emitted when tile_l does not divide L
            lane = lax.broadcasted_iota(jnp.int32, s.shape, 2)
            s = jnp.where(j * tile_l + lane < L, s, 0.0)

        ps = jnp.sum(s, axis=0)                               # (TC, TL)
        psq = jnp.sum(s * s, axis=0)
        mean_ref[...] += jnp.sum(ps, axis=1, keepdims=True)   # (TC, 1)
        scale_ref[...] += jnp.sum(psq, axis=1, keepdims=True)

        @pl.when(j == pl.num_programs(1) - 1)
        def _finalize():
            m = mean_ref[...] * inv_count
            var = jnp.maximum(scale_ref[...] * inv_count - m * m, 0.0)
            mean_ref[...] = m
            scale_ref[...] = lax.rsqrt(var + EPS)

    return kernel


def _normalize_kernel(x_ref, mean_ref, scale_ref, o_ref):
    s = _sigmoid_f32(x_ref[...])                              # (N, TC, TL)
    m = mean_ref[...][None, :, :]                             # (1, TC, 1)
    sc = scale_ref[...][None, :, :]
    o_ref[...] = ((s - m) * sc).astype(o_ref.dtype)


# ---------------------------------- wrapper -----------------------------------

def dscnn_block_lr_k5_forward(x, *, target_block_bytes=None,
                              vmem_limit_bytes=None, force_two_pass=False):
    """x: (N, C, L) -> (N, C, L); equals BatchNorm1d(affine=False)(sigmoid(x))."""
    N, C, L = x.shape
    if vmem_limit_bytes is None:
        vmem_limit_bytes = _default_vmem_limit()
    vmem_limit_bytes = int(vmem_limit_bytes)
    if target_block_bytes is None:
        target_block_bytes = max(1 << 20, min(4 << 20, vmem_limit_bytes // 12))

    in_item = x.dtype.itemsize
    sub_mult = _sublane_multiple(in_item)

    # ---- fused single-pass fast path: 1 read + 1 write of HBM ----
    if not force_two_pass:
        tile_c = _choose_fused_tile_c(N, C, L, in_item, in_item,
                                      int(vmem_limit_bytes * 0.9), sub_mult)
        if tile_c is not None:
            c_tiles = pl.cdiv(C, tile_c)
            return pl.pallas_call(
                _make_fused_kernel(N, L),
                out_shape=jax.ShapeDtypeStruct((N, C, L), x.dtype),
                grid=(c_tiles,),
                in_specs=[pl.BlockSpec((N, tile_c, L), lambda i: (0, i, 0))],
                out_specs=pl.BlockSpec((N, tile_c, L), lambda i: (0, i, 0)),
                compiler_params=pltpu.CompilerParams(
                    dimension_semantics=("parallel",),
                    vmem_limit_bytes=vmem_limit_bytes),
            )(x)

    # ---- 2-pass fallback: 2 reads + 1 write of HBM ----
    tile_c, tile_l = _choose_two_pass_tiles(N, C, L, in_item,
                                            target_block_bytes, sub_mult)
    c_tiles = pl.cdiv(C, tile_c)
    l_tiles = pl.cdiv(L, tile_l)

    # Pass 1: per-channel statistics (channel axis parallel, length axis is the
    # reduction / arbitrary axis; outputs act as resident accumulators).
    mean, scale = pl.pallas_call(
        _make_stats_kernel(N * L, L, tile_l),
        out_shape=(jax.ShapeDtypeStruct((C, 1), jnp.float32),
                   jax.ShapeDtypeStruct((C, 1), jnp.float32)),
        grid=(c_tiles, l_tiles),
        in_specs=[pl.BlockSpec((N, tile_c, tile_l), lambda i, j: (0, i, j))],
        out_specs=(pl.BlockSpec((tile_c, 1), lambda i, j: (i, 0)),
                   pl.BlockSpec((tile_c, 1), lambda i, j: (i, 0))),
        compiler_params=pltpu.CompilerParams(
            dimension_semantics=("parallel", "arbitrary"),
            vmem_limit_bytes=vmem_limit_bytes),
    )(x)

    # Pass 2: normalize (fully parallel grid, lane-dense output blocks).
    out = pl.pallas_call(
        _normalize_kernel,
        out_shape=jax.ShapeDtypeStruct((N, C, L), x.dtype),
        grid=(c_tiles, l_tiles),
        in_specs=[pl.BlockSpec((N, tile_c, tile_l), lambda i, j: (0, i, j)),
                  pl.BlockSpec((tile_c, 1), lambda i, j: (i, 0)),
                  pl.BlockSpec((tile_c, 1), lambda i, j: (i, 0))],
        out_specs=pl.BlockSpec((N, tile_c, tile_l), lambda i, j: (0, i, j)),
        compiler_params=pltpu.CompilerParams(
            dimension_semantics=("parallel", "parallel"),
            vmem_limit_bytes=vmem_limit_bytes),
    )(x, mean, scale)
    return out


def _reference(x):
    s = jax.nn.sigmoid(x.astype(jnp.float32))
    mean = jnp.mean(s, axis=(0, 2), keepdims=True)
    var = jnp.mean((s - mean) ** 2, axis=(0, 2), keepdims=True)
    return ((s - mean) / jnp.sqrt(var + EPS)).astype(x.dtype)


if __name__ == "__main__":
    # Primary small-shape check (fused single-pass path), NCL layout.
    N, C, L = 2, 4, 16
    x = jax.random.normal(jax.random.PRNGKey(0), (N, C, L), dtype=jnp.float32)
    out = jax.block_until_ready(dscnn_block_lr_k5_forward(x))
    ref = _reference(x)
    assert out.shape == (N, C, L)
    assert jnp.allclose(out, ref, atol=2e-5, rtol=2e-5), \
        float(jnp.max(jnp.abs(out - ref)))

    # Exercise the 2-pass fallback (tiled channel + length reduction grid).
    x2 = jax.random.normal(jax.random.PRNGKey(1), (2, 16, 512), dtype=jnp.float32)
    out2 = jax.block_until_ready(
        dscnn_block_lr_k5_forward(x2, target_block_bytes=16 * 1024,
                                  force_two_pass=True))
    ref2 = _reference(x2)
    assert jnp.allclose(out2, ref2, atol=5e-5, rtol=5e-5), \
        float(jnp.max(jnp.abs(out2 - ref2)))

    # Fused path with a bf16 input (16-sublane channel tiles, dtype preserved).
    x3 = jax.random.normal(jax.random.PRNGKey(2), (2, 16, 256), dtype=jnp.bfloat16)
    out3 = jax.block_until_ready(dscnn_block_lr_k5_forward(x3))
    ref3 = _reference(x3)
    assert out3.dtype == jnp.bfloat16
    assert jnp.allclose(out3.astype(jnp.float32), ref3.astype(jnp.float32),
                        atol=3e-2, rtol=3e-2)

    print("KERNEL_OK")
</pallas_src>

<mosaic_0001>
module attributes {stable_mosaic.version = 11 : i64} {
  func.func @kernel(%arg0: i32, %arg1: memref<2x4x16xf32, #tpu.memory_space<vmem>>, %arg2: memref<2x4x16xf32, #tpu.memory_space<vmem>>) attributes {dimension_semantics = [#tpu.dimension_semantics<parallel>], iteration_bounds = array<i64: 1>, scalar_prefetch = 0 : i64, scratch_operands = 0 : i64, tpu.core_type = #tpu.core_type<tc>, window_params = [{transform_indices = @transform_0, window_bounds = array<i64: 2, 4, 16>}, {transform_indices = @transform_1, window_bounds = array<i64: 2, 4, 16>}]} {
    %c0 = arith.constant 0 : index
    %c0_0 = arith.constant 0 : index
    %c0_1 = arith.constant 0 : index
    %0 = vector.load %arg1[%c0, %c0_0, %c0_1] : memref<2x4x16xf32, #tpu.memory_space<vmem>>, vector<2x4x16xf32>
    %cst = arith.constant 5.000000e-01 : f32
    %1 = vector.broadcast %cst : f32 to vector<2x4x16xf32>
    %2 = arith.mulf %1, %0 : vector<2x4x16xf32>
    %3 = math.tanh %2 : vector<2x4x16xf32>
    %cst_2 = arith.constant 5.000000e-01 : f32
    %4 = vector.broadcast %cst_2 : f32 to vector<2x4x16xf32>
    %5 = arith.mulf %4, %3 : vector<2x4x16xf32>
    %cst_3 = arith.constant 5.000000e-01 : f32
    %6 = vector.broadcast %cst_3 : f32 to vector<2x4x16xf32>
    %7 = arith.addf %5, %6 : vector<2x4x16xf32>
    %cst_4 = arith.constant dense<0.000000e+00> : vector<4x16xf32>
    %8 = vector.multi_reduction <add>, %7, %cst_4 [0] : vector<2x4x16xf32> to vector<4x16xf32>
    %cst_5 = arith.constant dense<0.000000e+00> : vector<4xf32>
    %9 = vector.multi_reduction <add>, %8, %cst_5 [1] : vector<4x16xf32> to vector<4xf32>
    %10 = vector.shape_cast %9 : vector<4xf32> to vector<4x1xf32>
    %cst_6 = arith.constant 3.125000e-02 : f32
    %11 = vector.broadcast %cst_6 : f32 to vector<4x1xf32>
    %12 = arith.mulf %10, %11 : vector<4x1xf32>
    %13 = vector.shape_cast %12 : vector<4x1xf32> to vector<1x4x1xf32>
    %14 = vector.broadcast %13 : vector<1x4x1xf32> to vector<2x4x16xf32>
    %15 = arith.subf %7, %14 : vector<2x4x16xf32>
    %16 = arith.mulf %15, %15 : vector<2x4x16xf32>
    %cst_7 = arith.constant dense<0.000000e+00> : vector<4x16xf32>
    %17 = vector.multi_reduction <add>, %16, %cst_7 [0] : vector<2x4x16xf32> to vector<4x16xf32>
    %cst_8 = arith.constant dense<0.000000e+00> : vector<4xf32>
    %18 = vector.multi_reduction <add>, %17, %cst_8 [1] : vector<4x16xf32> to vector<4xf32>
    %19 = vector.shape_cast %18 : vector<4xf32> to vector<4x1xf32>
    %cst_9 = arith.constant 3.125000e-02 : f32
    %20 = vector.broadcast %cst_9 : f32 to vector<4x1xf32>
    %21 = arith.mulf %19, %20 : vector<4x1xf32>
    %cst_10 = arith.constant 9.99999974E-6 : f32
    %22 = vector.broadcast %cst_10 : f32 to vector<4x1xf32>
    %23 = arith.addf %21, %22 : vector<4x1xf32>
    %24 = math.rsqrt %23 : vector<4x1xf32>
    %25 = vector.shape_cast %24 : vector<4x1xf32> to vector<1x4x1xf32>
    %26 = vector.broadcast %25 : vector<1x4x1xf32> to vector<2x4x16xf32>
    %27 = arith.mulf %15, %26 : vector<2x4x16xf32>
    %c0_11 = arith.constant 0 : index
    %c0_12 = arith.constant 0 : index
    %c0_13 = arith.constant 0 : index
    %28 = vector.load %arg2[%c0_11, %c0_12, %c0_13] : memref<2x4x16xf32, #tpu.memory_space<vmem>>, vector<2x4x16xf32>
    tpu.vector_store %arg2[%c0_11, %c0_12, %c0_13], %27 {strides = array<i32>} : memref<2x4x16xf32, #tpu.memory_space<vmem>>, vector<2x4x16xf32>,
    return
  }
  func.func @transform_0(%arg0: i32) -> (i32, i32, i32) {
    %c0_i32 = arith.constant 0 : i32
    %c0_i32_0 = arith.constant 0 : i32
    %c0_i32_1 = arith.constant 0 : i32
    return %c0_i32, %arg0, %c0_i32_0 : i32, i32, i32
  }
  func.func @transform_1(%arg0: i32) -> (i32, i32, i32) {
    %c0_i32 = arith.constant 0 : i32
    %c0_i32_0 = arith.constant 0 : i32
    %c0_i32_1 = arith.constant 0 : i32
    return %c0_i32, %arg0, %c0_i32_0 : i32, i32, i32
  }
}

</mosaic_0001>

<llo_original>
// kernel: tpu_custom_call.1
$region0: #{tpu_custom_call.1}
  #allocation0 [shape = 'u32[]', space=smem, size = 0x4, offset = 0x4, fixed_abs, tag = 'smem constant byte address 0x4 - core index']
  #allocation1 [shape = 'u32[144,128]{1,0:T(1,128)}', space=vmem, size = 0x12000, scoped, tag = 'internal scratch']
  %s0 = inlined_call_operand.hbm [shape: f32[2,4,16], index: 0, kind: input, shape index: {}]
  %s1 = inlined_call_operand.hbm [shape: f32[2,4,16], index: 1, kind: output, shape index: {}]
  %s2 = sld [smem:[#allocation0]]
  $region18: #{tpu_custom_call.1} parent=0
    _
  %s4 = ssub.s32 1, %s2
  %s5 = scalar_select 0, %s4, %s2
  $region1: #{tpu_custom_call.1} parent=0
    #allocation2 [shape = 'u8[4096]{0}', space=vmem, size = 0x1000, scoped, tag = 'input window, operand 0, single buffered']
    #allocation3 [shape = 's32[1]{0}', space=sflag, size = 0x4, scoped, tag = 'scoped memory for tpu_custom_call.1']
    #allocation4 [shape = 's32[1]{0}', space=sflag, size = 0x4, scoped, tag = 'scoped memory for tpu_custom_call.1']
    #allocation5 [shape = 'u8[4096]{0}', space=vmem, size = 0x1000, scoped, tag = 'output window, operand 0, single buffered']
    %6 = vsyncpa [#allocation3], 0
    %7 = vsyncpa [#allocation4], 0
    // Predicated region
    $region2: #{tpu_custom_call.1} parent=1 // pred_check
      _
    $region3: #{tpu_custom_call.1} parent=1 // pred_check_branch
      %9 = sbr.rel (0) target = $region5
    $region4: #{tpu_custom_call.1} parent=1 // pred_region
      %s11 = ssub.s32 128, 128
      %12 = vsyncadd [#allocation3], %s11
      %s13 = sshll.u32 [#allocation2], 4
      %s14 = int_to_ptr.vmem [resolvable:$true] %s13
      %19 = dma.hbm_to_vmem [thread:$0]  %s0, 128, %s14, [#allocation3], 64, 64, 4
    $region5: #{tpu_custom_call.1} parent=1 // pred_fallthru
      _
    // Predicated region
    $region6: #{tpu_custom_call.1} parent=1 // pred_check
      _
    $region7: #{tpu_custom_call.1} parent=1 // pred_check_branch
      %21 = sbr.rel (0) target = $region9
    $region8: #{tpu_custom_call.1} parent=1 // pred_region
      %22 = dma.done [#allocation3], 128
    $region9: #{tpu_custom_call.1} parent=1 // pred_fallthru
      _
    %v23 = vld [vmem:[#allocation2] sm:$0xf]
    %v24 = vld [vmem:[#allocation2 + $0x4] sm:$0xf]
    %v25 = vmul.f32 %v23, 0.5
    %v26 = vmul.f32 %v24, 0.5
    %v27 = vtanh.pop %v25
    %v28 = vtanh.pop %v26
    %v29 = vmul.f32 %v27, 0.5
    %v30 = vmul.f32 %v28, 0.5
    %v31 = vadd.f32 %v29, 0.5
    %v32 = vadd.f32 %v30, 0.5
    %vm33 = vcmask 125952
    %v34 = vsel %vm33, %v31, 0.0
    %v35 = vsel %vm33, %v32, 0.0
    %v36 = vadd.f32 %v34, %v35
    %v37 = vsel %vm33, %v36, 0.0
    %38 = vadd.xlane.f32.xlu0 %v37
    %v39 = vpop.xlane.xlu0 %38
    %v40 = vmul.f32 %v39, 0.03125
    %v41 = vsub.f32 %v31, %v40
    %v42 = vsub.f32 %v32, %v40
    %v43 = vmul.f32 %v41, %v41
    %v44 = vmul.f32 %v42, %v42
    %v45 = vsel %vm33, %v43, 0.0
    %v46 = vsel %vm33, %v44, 0.0
    %v47 = vadd.f32 %v45, %v46
    %v48 = vsel %vm33, %v47, 0.0
    %49 = vadd.xlane.f32.xlu0 %v48
    %v50 = vpop.xlane.xlu0 %49
    %v51 = vmul.f32 %v50, 0.03125
    %v52 = vadd.f32 %v51, 1e-05
    %v53 = vrsqrt.pop %v52
    %v54 = vmul.f32 %v41, %v53
    %v55 = vmul.f32 %v42, %v53
    %56 = vst.msk [vmem:[#allocation5] sm:$0xf] %vm33, %v54
    %57 = vst.msk [vmem:[#allocation5 + $0x4] sm:$0xf] %vm33, %v55
    // Predicated region
    $region10: #{tpu_custom_call.1} parent=1 // pred_check
      _
    $region11: #{tpu_custom_call.1} parent=1 // pred_check_branch
      %59 = sbr.rel (0) target = $region13
    $region12: #{tpu_custom_call.1} parent=1 // pred_region
      %s61 = ssub.s32 128, 128
      %62 = vsyncadd [#allocation4], %s61
      %s63 = sshll.u32 [#allocation5], 4
      %s64 = int_to_ptr.vmem [resolvable:$true] %s63
      %69 = dma.vmem_to_hbm [thread:$0]  %s64, 128, %s1, [#allocation4], 64, 64, 4
    $region13: #{tpu_custom_call.1} parent=1 // pred_fallthru
      _
    // Predicated region
    $region14: #{tpu_custom_call.1} parent=1 // pred_check
      _
    $region15: #{tpu_custom_call.1} parent=1 // pred_check_branch
      %71 = sbr.rel (0) target = $region17
    $region16: #{tpu_custom_call.1} parent=1 // pred_region
      %72 = dma.done [#allocation4], 128
    $region17: #{tpu_custom_call.1} parent=1 // pred_fallthru
      _
    %73 = vsyncpa [#allocation3], 1
    %74 = vsyncpa [#allocation4], 1

</llo_original>
